<compile_context>
chip_gen: v5e
topology: v5e:2x2
jax: 0.10.0
libtpu: 0.0.40
codegen_flags: <defaults>
</compile_context>

<pallas_src>
import functools

import jax
import jax.numpy as jnp
from jax.experimental import pallas as pl
from jax.experimental.pallas import tpu as pltpu


def _infer_vmem_limit_bytes() -> int:
    """Generation-aware scoped-VMEM cap: ~3/4 of physical, capped at 112 MiB."""
    try:
        cap = int(pltpu.get_tpu_info().vmem_capacity_bytes)
    except Exception:  # not queryable -> assume the smallest (v7x, 64 MiB/TC)
        cap = 64 * 1024 * 1024
    return max(32 * 1024 * 1024, min(cap * 3 // 4, 112 * 1024 * 1024))


_VMEM_LIMIT_BYTES = _infer_vmem_limit_bytes()
_BIG_VMEM = _VMEM_LIMIT_BYTES >= 80 * 1024 * 1024  # v5e/v6e-class (128 MiB)


def _pick_tile(n: int, cap: int, multiple: int) -> int:
    """Largest t <= cap with t % multiple == 0 and n % t == 0, else n (full dim).

    `multiple` is 128 for lane (last) dims, 8 for second-minor dims, so every
    emitted BlockSpec satisfies the (8, 128) divisibility rule.
    """
    if n <= cap:
        return n
    t = (cap // multiple) * multiple
    while t >= multiple:
        if n % t == 0:
            return t
        t -= multiple
    # TODO(synk): padded cdiv grid fallback for awkward (prime-ish) extents.
    return n


def _pick_div(n: int, cap: int) -> int:
    """Largest divisor of n that is <= cap."""
    d = max(1, min(n, cap))
    while n % d:
        d -= 1
    return d


# ---------------------------------------------------------------------------
# Tiled projection:  y[R, N] = x[R, K] @ w_t[K, N]   (w_t already [in, out],
# already in the compute dtype).  Grid = (rows, N-tiles, K-tiles), K last.
# ---------------------------------------------------------------------------
def _matmul_kernel(x_ref, w_ref, o_ref, acc_ref, *, compute_dtype):
    @pl.when(pl.program_id(2) == 0)
    def _():
        acc_ref[...] = jnp.zeros_like(acc_ref)

    acc_ref[...] += jnp.dot(
        x_ref[...].astype(compute_dtype),   # no-op when x is already compute dtype
        w_ref[...],                          # weights pre-cast in the wrapper
        preferred_element_type=jnp.float32,
    )

    @pl.when(pl.program_id(2) == pl.num_programs(2) - 1)
    def _():
        o_ref[...] = acc_ref[...].astype(o_ref.dtype)


def _projection(x, w_t, *, out_dtype, compute_dtype):
    R, K = x.shape
    Kw, N = w_t.shape
    assert K == Kw
    tm = _pick_tile(R, 512 if _BIG_VMEM else 256, 8)     # row tile (sublane)
    tn = _pick_tile(N, 512, 128)                          # output tile (lane)
    tk = _pick_tile(K, 1024 if _BIG_VMEM else 512, 128)   # contraction tile

    kernel = functools.partial(_matmul_kernel, compute_dtype=compute_dtype)
    x_isz = jnp.dtype(x.dtype).itemsize
    w_isz = jnp.dtype(w_t.dtype).itemsize
    o_isz = jnp.dtype(out_dtype).itemsize
    cost = pl.CostEstimate(
        flops=int(2 * R * K * N),
        transcendentals=0,
        bytes_accessed=int(R * K * (N // tn) * x_isz    # x re-read per N sweep
                           + K * N * (R // tm) * w_isz  # w re-read per row sweep
                           + R * N * o_isz),
    )
    return pl.pallas_call(
        kernel,
        out_shape=jax.ShapeDtypeStruct((R, N), out_dtype),
        grid_spec=pltpu.PrefetchScalarGridSpec(
            num_scalar_prefetch=0,
            grid=(R // tm, N // tn, K // tk),
            in_specs=[
                pl.BlockSpec((tm, tk), lambda i, j, k: (i, k)),
                pl.BlockSpec((tk, tn), lambda i, j, k: (k, j)),
            ],
            out_specs=pl.BlockSpec((tm, tn), lambda i, j, k: (i, j)),
            scratch_shapes=[pltpu.VMEM((tm, tn), jnp.float32)],
        ),
        compiler_params=pltpu.CompilerParams(
            dimension_semantics=("parallel", "parallel", "arbitrary"),
            vmem_limit_bytes=_VMEM_LIMIT_BYTES,
        ),
        cost_estimate=cost,
    )(x, w_t)


# ---------------------------------------------------------------------------
# Flash-style attention with online softmax, head tiling, reading q/k/v from a
# single (B, 3, H, S, hd) slab.  NOTE: no 1/sqrt(hd) scaling — matches the
# reference module exactly.
# ---------------------------------------------------------------------------
def _flash_kernel(q_ref, k_ref, v_ref, o_ref, m_sc, l_sc, acc_sc, *, exact):
    kv = pl.program_id(3)

    @pl.when(kv == 0)
    def _():
        m_sc[...] = jnp.full_like(m_sc, -jnp.inf)
        l_sc[...] = jnp.zeros_like(l_sc)
        acc_sc[...] = jnp.zeros_like(acc_sc)

    q = q_ref[...]          # (Hb, tq, hd) — head-leading, compute dtype
    k = k_ref[...]          # (Hb, tk, hd)
    v = v_ref[...]          # (Hb, tk, hd)

    # Head-batched q @ k.T on the MXU, f32 accumulation.  No score scaling.
    s = jnp.einsum("hqd,hkd->hqk", q, k, preferred_element_type=jnp.float32)

    m_prev = m_sc[...]
    m_new = jnp.maximum(m_prev, s.max(axis=-1, keepdims=True))
    alpha = jnp.exp(m_prev - m_new)                    # f32 on all chips
    p = jnp.exp(s - m_new)                             # f32 softmax numerator
    l_sc[...] = alpha * l_sc[...] + p.sum(axis=-1, keepdims=True)
    acc_sc[...] = alpha * acc_sc[...] + jnp.einsum(
        "hqk,hkd->hqd", p.astype(v.dtype), v, preferred_element_type=jnp.float32)
    m_sc[...] = m_new

    @pl.when(kv == pl.num_programs(3) - 1)
    def _():
        # Exact reciprocal on the f32 path (tiny (Hb, tq, 1) op), approx (EUP,
        # ~free) on the bf16 fast path.
        inv_l = pl.reciprocal(l_sc[...], approx=not exact)
        o_ref[...] = (acc_sc[...] * inv_l).astype(o_ref.dtype)
        # TODO(synk): in-kernel XLU transpose to write a lane-dense (tq, Hb*hd)
        # head-column block of a (B, S, D) output and drop the wrapper transpose.


def _flash_attention(qkv_heads, *, compute_dtype):
    """qkv_heads: (B, 3, H, S, hd) in compute dtype. Returns (B, H, S, hd)."""
    B, three, H, S, hd = qkv_heads.shape
    assert three == 3
    tq = _pick_tile(S, 256 if _BIG_VMEM else 128, 8)
    tk = _pick_tile(S, 512 if _BIG_VMEM else 256, 8)
    Hb = _pick_div(H, 8)    # head tile: caps f32 s/p temporaries, v7x friendly

    exact = jnp.dtype(compute_dtype) == jnp.dtype(jnp.float32)
    kernel = functools.partial(_flash_kernel, exact=exact)

    isz = jnp.dtype(qkv_heads.dtype).itemsize
    qo_bytes = B * H * S * hd * isz
    cost = pl.CostEstimate(
        flops=int(4 * B * H * S * S * hd),
        transcendentals=int(B * H * S * S),
        # q + out once, k/v re-read once per q-tile sweep.
        bytes_accessed=int(qo_bytes * (2 + 2 * (S // tq))),
    )

    q_spec = pl.BlockSpec((None, None, Hb, tq, hd), lambda b, h, qi, ki: (b, 0, h, qi, 0))
    k_spec = pl.BlockSpec((None, None, Hb, tk, hd), lambda b, h, qi, ki: (b, 1, h, ki, 0))
    v_spec = pl.BlockSpec((None, None, Hb, tk, hd), lambda b, h, qi, ki: (b, 2, h, ki, 0))
    o_spec = pl.BlockSpec((None, Hb, tq, hd), lambda b, h, qi, ki: (b, h, qi, 0))

    return pl.pallas_call(
        kernel,
        out_shape=jax.ShapeDtypeStruct((B, H, S, hd), qkv_heads.dtype),
        grid_spec=pltpu.PrefetchScalarGridSpec(
            num_scalar_prefetch=0,
            grid=(B, H // Hb, S // tq, S // tk),
            in_specs=[q_spec, k_spec, v_spec],
            out_specs=o_spec,
            scratch_shapes=[
                pltpu.VMEM((Hb, tq, 1), jnp.float32),    # running max m
                pltpu.VMEM((Hb, tq, 1), jnp.float32),    # running denom l
                pltpu.VMEM((Hb, tq, hd), jnp.float32),   # output accumulator
            ],
        ),
        compiler_params=pltpu.CompilerParams(
            dimension_semantics=("parallel", "parallel", "parallel", "arbitrary"),
            vmem_limit_bytes=_VMEM_LIMIT_BYTES,
        ),
        cost_estimate=cost,
    )(qkv_heads, qkv_heads, qkv_heads)   # same slab, three index maps (no copies)


# ---------------------------------------------------------------------------
# Full forward (use_sp=False path).
# ---------------------------------------------------------------------------
def attention_forward(x, wq, wk, wv, wo, n_heads, *, compute_dtype=jnp.bfloat16):
    """x: (B, S, D). w*: (D, D) in nn.Linear [out, in] layout."""
    B, S, D = x.shape
    H = n_heads
    hd = D // H

    # Weight prep: [out,in] -> [in,out] (canonical MXU RHS), Q/K/V fused into a
    # single (D, 3D) matmul, pre-cast to the compute dtype once (ideally this
    # would live at param-prep time, not per forward).
    w_qkv_t = jnp.concatenate([wq.T, wk.T, wv.T], axis=1).astype(compute_dtype)  # (D, 3D)
    wo_t = wo.T.astype(compute_dtype)                                            # (D, D)

    x_flat = x.reshape(B * S, D)                             # batch folded, lane-dense
    # QKV projection emitted in the compute dtype (halves intermediate HBM traffic).
    qkv = _projection(x_flat, w_qkv_t, out_dtype=compute_dtype,
                      compute_dtype=compute_dtype)           # (B*S, 3D)

    # Single fused relayout to head-leading layout (replaces split + 3 per-tensor
    # transposes of the previous revision): (B*S, 3D) -> (B, S, 3, H, hd) [free
    # reshape] -> (B, 3, H, S, hd) [one pass, at compute-dtype width].
    qkv_heads = qkv.reshape(B, S, 3, H, hd).transpose(0, 2, 3, 1, 4)

    attn = _flash_attention(qkv_heads, compute_dtype=compute_dtype)   # (B, H, S, hd)

    # TODO(synk): fold this last relayout into the flash finalize (in-VMEM XLU
    # transpose + head-column write into a (B, S, D) slab).
    attn = attn.transpose(0, 2, 1, 3).reshape(B * S, D)

    out = _projection(attn, wo_t, out_dtype=x.dtype,
                      compute_dtype=compute_dtype)            # (B*S, D), x.dtype
    return out.reshape(B, S, D)

    # TODO(synk): use_sp=True path (all_to_all over _SP_GROUP) is a multi-device
    # collective (head-scatter / sequence-gather); not implemented in this
    # single-device kernel.


def attention_reference(x, wq, wk, wv, wo, n_heads):
    """Pure-JAX reference mirroring the PyTorch forward (use_sp=False)."""
    B, S, D = x.shape
    hd = D // n_heads
    q = jnp.einsum("bsd,ed->bse", x, wq)
    k = jnp.einsum("bsd,ed->bse", x, wk)
    v = jnp.einsum("bsd,ed->bse", x, wv)
    q = q.reshape(B, S, n_heads, hd).transpose(0, 2, 1, 3)
    k = k.reshape(B, S, n_heads, hd).transpose(0, 2, 1, 3)
    v = v.reshape(B, S, n_heads, hd).transpose(0, 2, 1, 3)
    scores = jnp.einsum("bhqd,bhkd->bhqk", q, k)            # no 1/sqrt(hd) scale
    probs = jax.nn.softmax(scores.astype(jnp.float32), axis=-1).astype(q.dtype)
    out = jnp.einsum("bhqk,bhkd->bhqd", probs, v)
    out = out.transpose(0, 2, 1, 3).reshape(B, S, D)
    return jnp.einsum("bsd,ed->bse", out, wo)


if __name__ == "__main__":
    # Small shapes consistent with the module: bsz=2, seqlen=8, dim=32, heads=4.
    B, S, D, H = 2, 8, 32, 4

    key = jax.random.PRNGKey(0)
    kx, kq, kk_, kv_, ko = jax.random.split(key, 5)
    x = jax.random.normal(kx, (B, S, D), dtype=jnp.float32)
    scale = 1.0 / jnp.sqrt(jnp.float32(D))
    wq = jax.random.normal(kq, (D, D), dtype=jnp.float32) * scale
    wk = jax.random.normal(kk_, (D, D), dtype=jnp.float32) * scale
    wv = jax.random.normal(kv_, (D, D), dtype=jnp.float32) * scale
    wo = jax.random.normal(ko, (D, D), dtype=jnp.float32) * scale

    ref = attention_reference(x, wq, wk, wv, wo, H)

    # Exact-numerics path (f32 MXU operands, exact reciprocal) — tight check.
    out_f32 = attention_forward(x, wq, wk, wv, wo, H, compute_dtype=jnp.float32)
    out_f32 = jax.block_until_ready(out_f32)
    assert out_f32.shape == (B, S, D)
    assert jnp.allclose(out_f32, ref, atol=1e-4, rtol=1e-4), "f32 mismatch vs reference"

    # Fast path (bf16 MXU operands / intermediates, f32 accumulation & softmax)
    # — loose check, tolerance widened for bf16 operand rounding.
    out_bf16 = attention_forward(x, wq, wk, wv, wo, H)  # default compute_dtype=bf16
    out_bf16 = jax.block_until_ready(out_bf16)
    assert out_bf16.shape == (B, S, D)
    assert jnp.allclose(out_bf16, ref, atol=3e-1, rtol=1e-1), "bf16 mismatch vs reference"

    print("KERNEL_OK")
</pallas_src>

<mosaic_0001>
module attributes {stable_mosaic.version = 11 : i64} {
  func.func @_matmul_kernel(%arg0: i32, %arg1: i32, %arg2: i32, %arg3: memref<16x32xf32, #tpu.memory_space<vmem>>, %arg4: memref<32x96xf32, #tpu.memory_space<vmem>>, %arg5: memref<16x96xf32, #tpu.memory_space<vmem>>, %arg6: memref<16x96xf32, #tpu.memory_space<vmem>>) attributes {dimension_semantics = [#tpu.dimension_semantics<parallel>, #tpu.dimension_semantics<parallel>, #tpu.dimension_semantics<arbitrary>], iteration_bounds = array<i64: 1, 1, 1>, scalar_prefetch = 0 : i64, scratch_operands = 1 : i64, tpu.core_type = #tpu.core_type<tc>, window_params = [{transform_indices = @transform_0, window_bounds = array<i64: 16, 32>}, {transform_indices = @transform_1, window_bounds = array<i64: 32, 96>}, {transform_indices = @transform_2, window_bounds = array<i64: 16, 96>}]} {
    %c0_i32 = arith.constant 0 : i32
    %0 = arith.cmpi eq, %arg2, %c0_i32 : i32
    %1 = arith.extui %0 : i1 to i32
    %c0_i32_0 = arith.constant 0 : i32
    %2 = arith.cmpi ne, %1, %c0_i32_0 : i32
    scf.if %2 {
      %cst_10 = arith.constant 0.000000e+00 : f32
      %12 = vector.broadcast %cst_10 : f32 to vector<16x96xf32>
      %c0_11 = arith.constant 0 : index
      %c0_12 = arith.constant 0 : index
      %13 = vector.load %arg6[%c0_11, %c0_12] : memref<16x96xf32, #tpu.memory_space<vmem>>, vector<16x96xf32>
      tpu.vector_store %arg6[%c0_11, %c0_12], %12 {strides = array<i32>} : memref<16x96xf32, #tpu.memory_space<vmem>>, vector<16x96xf32>,
    } else {
    }
    %c0 = arith.constant 0 : index
    %c0_1 = arith.constant 0 : index
    %3 = vector.load %arg6[%c0, %c0_1] : memref<16x96xf32, #tpu.memory_space<vmem>>, vector<16x96xf32>
    %c0_2 = arith.constant 0 : index
    %c0_3 = arith.constant 0 : index
    %4 = vector.load %arg3[%c0_2, %c0_3] : memref<16x32xf32, #tpu.memory_space<vmem>>, vector<16x32xf32>
    %c0_4 = arith.constant 0 : index
    %c0_5 = arith.constant 0 : index
    %5 = vector.load %arg4[%c0_4, %c0_5] : memref<32x96xf32, #tpu.memory_space<vmem>>, vector<32x96xf32>
    %cst = arith.constant dense<0.000000e+00> : vector<16x96xf32>
    %6 = tpu.matmul %4, %5, %cst {dimension_numbers = #tpu.dot_dimension_numbers<[1], [0], [0], [1], [0, 0, 1, 1], [], []>} : vector<16x32xf32>, vector<32x96xf32>, vector<16x96xf32> -> vector<16x96xf32>
    %7 = arith.addf %3, %6 : vector<16x96xf32>
    %c0_6 = arith.constant 0 : index
    %c0_7 = arith.constant 0 : index
    %8 = vector.load %arg6[%c0_6, %c0_7] : memref<16x96xf32, #tpu.memory_space<vmem>>, vector<16x96xf32>
    tpu.vector_store %arg6[%c0_6, %c0_7], %7 {strides = array<i32>} : memref<16x96xf32, #tpu.memory_space<vmem>>, vector<16x96xf32>,
    %c0_i32_8 = arith.constant 0 : i32
    %9 = arith.cmpi eq, %arg2, %c0_i32_8 : i32
    %10 = arith.extui %9 : i1 to i32
    %c0_i32_9 = arith.constant 0 : i32
    %11 = arith.cmpi ne, %10, %c0_i32_9 : i32
    scf.if %11 {
      %c0_10 = arith.constant 0 : index
      %c0_11 = arith.constant 0 : index
      %12 = vector.load %arg6[%c0_10, %c0_11] : memref<16x96xf32, #tpu.memory_space<vmem>>, vector<16x96xf32>
      %c0_12 = arith.constant 0 : index
      %c0_13 = arith.constant 0 : index
      %13 = vector.load %arg5[%c0_12, %c0_13] : memref<16x96xf32, #tpu.memory_space<vmem>>, vector<16x96xf32>
      tpu.vector_store %arg5[%c0_12, %c0_13], %12 {strides = array<i32>} : memref<16x96xf32, #tpu.memory_space<vmem>>, vector<16x96xf32>,
    } else {
    }
    return
  }
  func.func @transform_0(%arg0: i32, %arg1: i32, %arg2: i32) -> (i32, i32) {
    %c0_i32 = arith.constant 0 : i32
    return %arg0, %arg2 : i32, i32
  }
  func.func @transform_1(%arg0: i32, %arg1: i32, %arg2: i32) -> (i32, i32) {
    %c0_i32 = arith.constant 0 : i32
    return %arg2, %arg1 : i32, i32
  }
  func.func @transform_2(%arg0: i32, %arg1: i32, %arg2: i32) -> (i32, i32) {
    %c0_i32 = arith.constant 0 : i32
    return %arg0, %arg1 : i32, i32
  }
}

</mosaic_0001>

<llo_original>
// kernel: tpu_custom_call.1
$region0: #{tpu_custom_call.1}
  #allocation0 [shape = 'u32[]', space=smem, size = 0x4, offset = 0x4, fixed_abs, tag = 'smem constant byte address 0x4 - core index']
  #allocation1 [shape = 'u32[72,128]{1,0:T(1,128)}', space=vmem, size = 0x9000, scoped, tag = 'internal scratch']
  #allocation2 [shape = 'f32[16,96]{1,0:T(8,128)}', space=vmem, size = 0x2000, scoped, tag = 'scratch operand']
  %s0 = inlined_call_operand.hbm [shape: f32[16,32], index: 0, kind: input, shape index: {}]
  %s1 = inlined_call_operand.hbm [shape: f32[32,96], index: 1, kind: input, shape index: {}]
  %s2 = inlined_call_operand.hbm [shape: f32[16,96], index: 2, kind: output, shape index: {}]
  %s3 = sld [smem:[#allocation0]]
  $region34: #{tpu_custom_call.1} parent=0
    _
  %s5 = ssub.s32 1, %s3
  %s6 = scalar_select 0, %s5, %s3
  $region1: #{tpu_custom_call.1} parent=0
    #allocation3 [shape = 'u8[8192]{0}', space=vmem, size = 0x2000, scoped, tag = 'input window, operand 0, single buffered']
    #allocation4 [shape = 's32[1]{0}', space=sflag, size = 0x4, scoped, tag = 'scoped memory for tpu_custom_call.1']
    #allocation5 [shape = 's32[1]{0}', space=sflag, size = 0x4, scoped, tag = 'scoped memory for tpu_custom_call.1']
    #allocation6 [shape = 'u8[16384]{0}', space=vmem, size = 0x4000, scoped, tag = 'input window, operand 1, single buffered']
    #allocation7 [shape = 's32[1]{0}', space=sflag, size = 0x4, scoped, tag = 'scoped memory for tpu_custom_call.1']
    #allocation8 [shape = 'u8[8192]{0}', space=vmem, size = 0x2000, scoped, tag = 'output window, operand 0, single buffered']
    %7 = vsyncpa [#allocation4], 0
    %8 = vsyncpa [#allocation7], 0
    %9 = vsyncpa [#allocation5], 0
    // Predicated region
    $region2: #{tpu_custom_call.1} parent=1 // pred_check
      _
    $region3: #{tpu_custom_call.1} parent=1 // pred_check_branch
      %11 = sbr.rel (0) target = $region5
    $region4: #{tpu_custom_call.1} parent=1 // pred_region
      %13 = vsyncadd [#allocation4], 0
      %s14 = sshll.u32 %s0, 4
      %s15 = int_to_ptr.hbm [resolvable:$true] %s14
      %s16 = sshll.u32 [#allocation3], 4
      %s17 = int_to_ptr.vmem [resolvable:$true] %s16
      %22 = dma.hbm_to_vmem [thread:$0]  %s15, 256, %s17, [#allocation4], 128, 128, 8
    $region5: #{tpu_custom_call.1} parent=1 // pred_fallthru
      _
    // Predicated region
    $region6: #{tpu_custom_call.1} parent=1 // pred_check
      _
    $region7: #{tpu_custom_call.1} parent=1 // pred_check_branch
      %24 = sbr.rel (0) target = $region9
    $region8: #{tpu_custom_call.1} parent=1 // pred_region
      %26 = vsyncadd [#allocation7], 0
      %s27 = sshll.u32 %s1, 4
      %s28 = int_to_ptr.hbm [resolvable:$true] %s27
      %s29 = sshll.u32 [#allocation6], 4
      %s30 = int_to_ptr.vmem [resolvable:$true] %s29
      %35 = dma.hbm_to_vmem [thread:$0]  %s28, 512, %s30, [#allocation7], 128, 128, 8
    $region9: #{tpu_custom_call.1} parent=1 // pred_fallthru
      _
    // Predicated region
    $region10: #{tpu_custom_call.1} parent=1 // pred_check
      _
    $region11: #{tpu_custom_call.1} parent=1 // pred_check_branch
      %37 = sbr.rel (0) target = $region13
    $region12: #{tpu_custom_call.1} parent=1 // pred_region
      %39 = dma.done [#allocation4], 256
    $region13: #{tpu_custom_call.1} parent=1 // pred_fallthru
      _
    // Predicated region
    $region14: #{tpu_custom_call.1} parent=1 // pred_check
      _
    $region15: #{tpu_custom_call.1} parent=1 // pred_check_branch
      %41 = sbr.rel (0) target = $region17
    $region16: #{tpu_custom_call.1} parent=1 // pred_region
      %43 = dma.done [#allocation7], 512
    $region17: #{tpu_custom_call.1} parent=1 // pred_fallthru
      _
    %p44 = scmp.eq.s32.totalorder 0, 0
    // Predicated region
    $region18: #{tpu_custom_call.1} parent=1 // pred_check
      %p45 = pneg %p44
    $region19: #{tpu_custom_call.1} parent=1 // pred_check_branch
      %47 = sbr.rel (%p45) target = $region21
    $region20: #{tpu_custom_call.1} parent=1 // pred_region
      %vm48 = vcmask 785408
      %49 = vst.msk [vmem:[#allocation2] sm:$0xff] %vm48, 0.0
      %50 = vst.msk [vmem:[#allocation2 + $0x8] sm:$0xff] %vm48, 0.0
    $region21: #{tpu_custom_call.1} parent=1 // pred_fallthru
      _
    %v51 = vld [vmem:[#allocation2] sm:$0xff]
    %v52 = vld [vmem:[#allocation2 + $0x8] sm:$0xff]
    %v53 = vld [vmem:[#allocation3] sm:$0xff]
    %v54 = vld [vmem:[#allocation3 + $0x8] sm:$0xff]
    %v55 = vld [vmem:[#allocation6] sm:$0xff]
    %v56 = vld [vmem:[#allocation6 + $0x8] sm:$0xff]
    %v57 = vld [vmem:[#allocation6 + $0x10] sm:$0xff]
    %v58 = vld [vmem:[#allocation6 + $0x18] sm:$0xff]
    %vm59 = vcmask 261120
    %v61 = vsel %vm59, %v53, 0
    %v64 = vsel %vm59, %v54, 0
    %66 = vmatpush.msra.mxu0 0.0
    %67 = vmatpush.msra.mxu0 0.0
    %68 = vmatpush.msra.mxu0 0.0
    %69 = vmatpush.msra.mxu0 0.0
    %70 = vmatpush.msra.mxu0 0.0
    %71 = vmatpush.msra.mxu0 0.0
    %72 = vmatpush.msra.mxu0 0.0
    %73 = vmatpush.msra.mxu0 0.0
    %74 = vmatpush.msra.mxu0 0.0
    %75 = vmatpush.msra.mxu0 0.0
    %76 = vmatpush.msra.mxu0 0.0
    %77 = vmatpush.msra.mxu0 0.0
    %78 = vmatpush.msra.mxu0 %v58
    %79 = vmatpush.msra.mxu0 %v57
    %80 = vmatpush.msra.mxu0 %v56
    %81 = vmatpush.msra.mxu0 %v55
    %82 = vmatmul.f32.gmra.mxu0 %v61
    %v83 = vpop.f32.mrf.mxu0
    %v84 = vadd.f32 0.0, %v83
    %85 = vmatmul.f32.gmra.mxu0 %v64
    %v86 = vpop.f32.mrf.mxu0
    %v87 = vadd.f32 0.0, %v86
    %88 = vdwg.mxu0
    %v89 = vadd.f32 %v51, %v84
    %v90 = vadd.f32 %v52, %v87
    %vm91 = vcmask 785408
    %92 = vst.msk [vmem:[#allocation2] sm:$0xff] %vm91, %v89
    %93 = vst.msk [vmem:[#allocation2 + $0x8] sm:$0xff] %vm91, %v90
    // Predicated region
    $region22: #{tpu_custom_call.1} parent=1 // pred_check
      %p94 = pneg %p44
    $region23: #{tpu_custom_call.1} parent=1 // pred_check_branch
      %96 = sbr.rel (%p94) target = $region25
    $region24: #{tpu_custom_call.1} parent=1 // pred_region
      %v97 = vld [vmem:[#allocation2] sm:$0xff]
      %v98 = vld [vmem:[#allocation2 + $0x8] sm:$0xff]
      %99 = vst.msk [vmem:[#allocation8] sm:$0xff] %vm91, %v97
      %100 = vst.msk [vmem:[#allocation8 + $0x8] sm:$0xff] %vm91, %v98
    $region25: #{tpu_custom_call.1} parent=1 // pred_fallthru
      _
    // Predicated region
    $region26: #{tpu_custom_call.1} parent=1 // pred_check
      _
    $region27: #{tpu_custom_call.1} parent=1 // pred_check_branch
      %102 = sbr.rel (0) target = $region29
    $region28: #{tpu_custom_call.1} parent=1 // pred_region
      %104 = vsyncadd [#allocation5], 0
      %s105 = sshll.u32 [#allocation8], 4
      %s106 = int_to_ptr.vmem [resolvable:$true] %s105
      %s107 = sshll.u32 %s2, 4
      %s108 = int_to_ptr.hbm [resolvable:$true] %s107
      %113 = dma.vmem_to_hbm [thread:$0]  %s106, 256, %s108, [#allocation5], 128, 128, 8
    $region29: #{tpu_custom_call.1} parent=1 // pred_fallthru
      _
    // Predicated region
    $region30: #{tpu_custom_call.1} parent=1 // pred_check
      _
    $region31: #{tpu_custom_call.1} parent=1 // pred_check_branch
      %115 = sbr.rel (0) target = $region33
    $region32: #{tpu_custom_call.1} parent=1 // pred_region
      %117 = dma.done [#allocation5], 256
    $region33: #{tpu_custom_call.1} parent=1 // pred_fallthru
      _
    %118 = vsyncpa [#allocation4], 1
    %119 = vsyncpa [#allocation7], 1
    %120 = vsyncpa [#allocation5], 1

</llo_original>
